<compile_context>
chip_gen: v5e
topology: v5e:2x2
jax: 0.10.0
libtpu: 0.0.40
codegen_flags: <defaults>
</compile_context>

<pallas_src>
import functools

import jax
import jax.numpy as jnp
from jax.experimental import pallas as pl
from jax.experimental.pallas import tpu as pltpu

BN_EPS = 1e-5


def _round_up(n, m):
    return ((n + m - 1) // m) * m


# ---------------------------------------------------------------------------
# Fused kernel: phase 0 = batch statistics (+ BN fold), phase 1 = BN + MLP.
# ---------------------------------------------------------------------------
def fused_net_kernel(x_ref, gamma_ref, beta_ref, w1_ref, b1_ref,
                     w2_ref, b2_ref, w3_ref, b3_ref, out_ref,
                     sum_sc, sq_sc, scale_sc, shift_sc,
                     *, batch, tile_rows, out_cols):
    phase = pl.program_id(0)
    tile = pl.program_id(1)
    n_tiles = pl.num_programs(1)

    @pl.when(phase == 0)
    def _stats():
        @pl.when(tile == 0)
        def _():
            sum_sc[...] = jnp.zeros_like(sum_sc)
            sq_sc[...] = jnp.zeros_like(sq_sc)

        # Mask rows past the true batch size (ragged last tile reads are
        # unspecified data and must not corrupt the statistics).
        row = tile * tile_rows + jax.lax.broadcasted_iota(
            jnp.int32, x_ref.shape, 0)
        x = jnp.where(row < batch, x_ref[...], 0.0)
        sum_sc[...] += jnp.sum(x, axis=0, keepdims=True)
        sq_sc[...] += jnp.sum(x * x, axis=0, keepdims=True)

        @pl.when(tile == n_tiles - 1)
        def _finalize():
            inv_b = 1.0 / batch
            mean = sum_sc[...] * inv_b
            var = jnp.maximum(sq_sc[...] * inv_b - mean * mean, 0.0)
            scale = gamma_ref[...] * jax.lax.rsqrt(var + BN_EPS)
            scale_sc[...] = scale
            shift_sc[...] = beta_ref[...] - mean * scale

    @pl.when(phase == 1)
    def _mlp():
        h = x_ref[...] * scale_sc[...] + shift_sc[...]
        h = jnp.maximum(
            jnp.dot(h, w1_ref[...], preferred_element_type=jnp.float32)
            + b1_ref[...], 0.0)
        h = jnp.maximum(
            jnp.dot(h, w2_ref[...], preferred_element_type=jnp.float32)
            + b2_ref[...], 0.0)
        out = jnp.dot(h, w3_ref[...], preferred_element_type=jnp.float32)
        # w3 is padded to 128 output columns for the MXU; store only the real
        # action columns (narrow masked store, but ~32x fewer HBM bytes).
        out_ref[...] = (out[:, :out_cols] + b3_ref[...]).astype(out_ref.dtype)


def prepare_params(params):
    """One-time parameter padding/cast (hoisted out of the per-call path).

    Hidden / action dims of the (tiny, resident) weights are zero-padded to
    multiples of 128 for clean MXU lowering; padded rows/cols are inert.
    Weights are stored transposed as (in_features, out_features)."""
    f32 = jnp.float32
    H1 = params["w1"].shape[1]
    H2 = params["w2"].shape[1]
    A = params["w3"].shape[1]
    H1p = _round_up(H1, 128)
    H2p = _round_up(H2, 128)
    Ap = _round_up(A, 128)
    return {
        "gamma": params["gamma"].astype(f32),
        "beta": params["beta"].astype(f32),
        "w1": jnp.pad(params["w1"].astype(f32), ((0, 0), (0, H1p - H1))),
        "b1": jnp.pad(params["b1"].astype(f32), ((0, 0), (0, H1p - H1))),
        "w2": jnp.pad(params["w2"].astype(f32),
                      ((0, H1p - H1), (0, H2p - H2))),
        "b2": jnp.pad(params["b2"].astype(f32), ((0, 0), (0, H2p - H2))),
        "w3": jnp.pad(params["w3"].astype(f32),
                      ((0, H2p - H2), (0, Ap - A))),
        "b3": params["b3"].astype(f32),          # (1, A) -- true action dim
    }


def net_forward(x, prepped, *, tile_b=4096):
    """x: (B, F) float. prepped: output of prepare_params()."""
    B, F = x.shape
    A = prepped["b3"].shape[1]
    if x.dtype != jnp.float32:
        # TODO(synk): for bf16 callers, keep x bf16 end-to-end (halves HBM read
        # traffic) and upcast in-kernel; kept f32 here to match the reference.
        x = x.astype(jnp.float32)

    # Row tile: big enough to amortize per-step overhead, multiple of 8, never
    # larger than the (rounded-up) batch.  VMEM use (double-buffered x + out
    # tiles + resident params) stays far below every generation's scoped limit.
    tb = _round_up(min(tile_b, _round_up(B, 8)), 8)
    n_tiles = pl.cdiv(B, tb)

    def resident(arr):
        # Full-array block with a constant block index: DMA'd once, stays
        # resident in VMEM across all grid iterations.
        return pl.BlockSpec(arr.shape, lambda p, i: (0,) * arr.ndim)

    param_order = ("gamma", "beta", "w1", "b1", "w2", "b2", "w3", "b3")
    param_arrays = [prepped[k] for k in param_order]
    param_bytes = sum(int(a.size) * 4 for a in param_arrays)
    H1p = prepped["w1"].shape[1]
    H2p = prepped["w2"].shape[1]
    Ap = prepped["w3"].shape[1]

    cost = pl.CostEstimate(
        flops=int(2 * B * (F * H1p + H1p * H2p + H2p * Ap) + 6 * B * F),
        transcendentals=int(F),
        bytes_accessed=int((2 * B * F + B * A) * 4 + param_bytes),
    )

    kernel = functools.partial(fused_net_kernel, batch=B, tile_rows=tb,
                               out_cols=A)

    out = pl.pallas_call(
        kernel,
        out_shape=jax.ShapeDtypeStruct((B, A), jnp.float32),
        grid=(2, n_tiles),
        in_specs=[pl.BlockSpec((tb, F), lambda p, i: (i, 0))]
                 + [resident(a) for a in param_arrays],
        out_specs=pl.BlockSpec((tb, A), lambda p, i: (i, 0)),
        scratch_shapes=[pltpu.VMEM((1, F), jnp.float32)] * 4,
        compiler_params=pltpu.CompilerParams(
            dimension_semantics=("arbitrary", "arbitrary")),
        cost_estimate=cost,
    )(x, *param_arrays)
    return out


def init_params(key, feature_dims, neuron_nums, action_nums):
    """Parameter init mirroring the PyTorch module.

    Hidden Linear layers use PyTorch's default U(-1/sqrt(fan_in), 1/sqrt(fan_in));
    the action head follows weight_init: U(-0.003, 0.003) weights, zero bias.
    BatchNorm gamma=1, beta=0. Weights stored transposed as (in, out)."""
    assert len(neuron_nums) == 2, "example wrapper is written for 2 hidden layers"
    dims = [feature_dims] + list(neuron_nums)
    keys = jax.random.split(key, 5)
    params = {
        "gamma": jnp.ones((1, feature_dims), jnp.float32),
        "beta": jnp.zeros((1, feature_dims), jnp.float32),
    }
    lim1 = 1.0 / jnp.sqrt(jnp.float32(dims[0]))
    params["w1"] = jax.random.uniform(keys[0], (dims[0], dims[1]), jnp.float32, -lim1, lim1)
    params["b1"] = jax.random.uniform(keys[1], (1, dims[1]), jnp.float32, -lim1, lim1)
    lim2 = 1.0 / jnp.sqrt(jnp.float32(dims[1]))
    params["w2"] = jax.random.uniform(keys[2], (dims[1], dims[2]), jnp.float32, -lim2, lim2)
    params["b2"] = jax.random.uniform(keys[3], (1, dims[2]), jnp.float32, -lim2, lim2)
    params["w3"] = jax.random.uniform(keys[4], (dims[2], action_nums), jnp.float32, -0.003, 0.003)
    params["b3"] = jnp.zeros((1, action_nums), jnp.float32)
    return params


def reference_forward(x, params):
    """Pure-JAX reference (same math as the PyTorch module in training mode)."""
    mean = jnp.mean(x, axis=0, keepdims=True)
    var = jnp.mean((x - mean) ** 2, axis=0, keepdims=True)
    h = (x - mean) / jnp.sqrt(var + BN_EPS) * params["gamma"] + params["beta"]
    h = jnp.maximum(h @ params["w1"] + params["b1"], 0.0)
    h = jnp.maximum(h @ params["w2"] + params["b2"], 0.0)
    return h @ params["w3"] + params["b3"]


if __name__ == "__main__":
    feature_dims = 16
    neuron_nums = [32, 32]
    action_nums = 4
    batch = 8  # BatchNorm1d training mode needs batch > 1 (PyTorch raises at 1)

    key = jax.random.PRNGKey(0)
    kx, kp, kx2 = jax.random.split(key, 3)
    params = init_params(kp, feature_dims, neuron_nums, action_nums)
    prepped = prepare_params(params)  # one-time padding/cast, outside call path

    # Small case (single tile, both phases over one block).
    x = jax.random.normal(kx, (batch, feature_dims), jnp.float32)
    out = jax.block_until_ready(net_forward(x, prepped))
    ref = reference_forward(x, params)
    assert out.shape == (batch, action_nums)
    assert jnp.allclose(out, ref, atol=1e-4, rtol=1e-4), "mismatch vs reference (small)"

    # Multi-tile case with a ragged last tile: exercises the fused stats phase,
    # the in-kernel row mask, and resident-parameter blocks across tiles.
    x_big = jax.random.normal(kx2, (300, feature_dims), jnp.float32)
    out_big = jax.block_until_ready(net_forward(x_big, prepped, tile_b=64))
    ref_big = reference_forward(x_big, params)
    assert out_big.shape == (300, action_nums)
    assert jnp.allclose(out_big, ref_big, atol=1e-4, rtol=1e-4), "mismatch vs reference (tiled)"

    print("KERNEL_OK")
</pallas_src>

<mosaic_0001>
module attributes {stable_mosaic.version = 11 : i64} {
  func.func @fused_net_kernel(%arg0: i32, %arg1: i32, %arg2: memref<8x16xf32, #tpu.memory_space<vmem>>, %arg3: memref<1x16xf32, #tpu.memory_space<vmem>>, %arg4: memref<1x16xf32, #tpu.memory_space<vmem>>, %arg5: memref<16x128xf32, #tpu.memory_space<vmem>>, %arg6: memref<1x128xf32, #tpu.memory_space<vmem>>, %arg7: memref<128x128xf32, #tpu.memory_space<vmem>>, %arg8: memref<1x128xf32, #tpu.memory_space<vmem>>, %arg9: memref<128x128xf32, #tpu.memory_space<vmem>>, %arg10: memref<1x4xf32, #tpu.memory_space<vmem>>, %arg11: memref<8x4xf32, #tpu.memory_space<vmem>>, %arg12: memref<1x16xf32, #tpu.memory_space<vmem>>, %arg13: memref<1x16xf32, #tpu.memory_space<vmem>>, %arg14: memref<1x16xf32, #tpu.memory_space<vmem>>, %arg15: memref<1x16xf32, #tpu.memory_space<vmem>>) attributes {dimension_semantics = [#tpu.dimension_semantics<arbitrary>, #tpu.dimension_semantics<arbitrary>], iteration_bounds = array<i64: 2, 1>, scalar_prefetch = 0 : i64, scratch_operands = 4 : i64, tpu.core_type = #tpu.core_type<tc>, window_params = [{transform_indices = @transform_0, window_bounds = array<i64: 8, 16>}, {pipeline_mode = #tpu.pipeline_mode<synchronous>, transform_indices = @transform_1, window_bounds = array<i64: 1, 16>}, {pipeline_mode = #tpu.pipeline_mode<synchronous>, transform_indices = @transform_2, window_bounds = array<i64: 1, 16>}, {pipeline_mode = #tpu.pipeline_mode<synchronous>, transform_indices = @transform_3, window_bounds = array<i64: 16, 128>}, {pipeline_mode = #tpu.pipeline_mode<synchronous>, transform_indices = @transform_4, window_bounds = array<i64: 1, 128>}, {pipeline_mode = #tpu.pipeline_mode<synchronous>, transform_indices = @transform_5, window_bounds = array<i64: 128, 128>}, {pipeline_mode = #tpu.pipeline_mode<synchronous>, transform_indices = @transform_6, window_bounds = array<i64: 1, 128>}, {pipeline_mode = #tpu.pipeline_mode<synchronous>, transform_indices = @transform_7, window_bounds = array<i64: 128, 128>}, {pipeline_mode = #tpu.pipeline_mode<synchronous>, transform_indices = @transform_8, window_bounds = array<i64: 1, 4>}, {transform_indices = @transform_9, window_bounds = array<i64: 8, 4>}]} {
    %c0_i32 = arith.constant 0 : i32
    %0 = arith.cmpi eq, %arg0, %c0_i32 : i32
    %1 = arith.extui %0 : i1 to i32
    %c0_i32_0 = arith.constant 0 : i32
    %2 = arith.cmpi ne, %1, %c0_i32_0 : i32
    scf.if %2 {
      %c0_i32_2 = arith.constant 0 : i32
      %6 = arith.cmpi eq, %arg1, %c0_i32_2 : i32
      %7 = arith.extui %6 : i1 to i32
      %c0_i32_3 = arith.constant 0 : i32
      %8 = arith.cmpi ne, %7, %c0_i32_3 : i32
      scf.if %8 {
        %cst_18 = arith.constant 0.000000e+00 : f32
        %32 = vector.broadcast %cst_18 : f32 to vector<1x16xf32>
        %c0_19 = arith.constant 0 : index
        %c0_20 = arith.constant 0 : index
        %33 = vector.load %arg12[%c0_19, %c0_20] : memref<1x16xf32, #tpu.memory_space<vmem>>, vector<1x16xf32>
        tpu.vector_store %arg12[%c0_19, %c0_20], %32 {strides = array<i32>} : memref<1x16xf32, #tpu.memory_space<vmem>>, vector<1x16xf32>,
        %cst_21 = arith.constant 0.000000e+00 : f32
        %34 = vector.broadcast %cst_21 : f32 to vector<1x16xf32>
        %c0_22 = arith.constant 0 : index
        %c0_23 = arith.constant 0 : index
        %35 = vector.load %arg13[%c0_22, %c0_23] : memref<1x16xf32, #tpu.memory_space<vmem>>, vector<1x16xf32>
        tpu.vector_store %arg13[%c0_22, %c0_23], %34 {strides = array<i32>} : memref<1x16xf32, #tpu.memory_space<vmem>>, vector<1x16xf32>,
      } else {
      }
      %c8_i32 = arith.constant 8 : i32
      %9 = arith.muli %arg1, %c8_i32 : i32
      %10 = tpu.iota {dimensions = array<i32: 0>} : vector<8x16xi32>
      %11 = vector.broadcast %9 : i32 to vector<8x16xi32>
      %12 = arith.addi %11, %10 : vector<8x16xi32>
      %c8_i32_4 = arith.constant 8 : i32
      %13 = vector.broadcast %c8_i32_4 : i32 to vector<8x16xi32>
      %14 = arith.cmpi slt, %12, %13 : vector<8x16xi32>
      %c0 = arith.constant 0 : index
      %c0_5 = arith.constant 0 : index
      %15 = vector.load %arg2[%c0, %c0_5] : memref<8x16xf32, #tpu.memory_space<vmem>>, vector<8x16xf32>
      %cst = arith.constant 0.000000e+00 : f32
      %16 = vector.broadcast %cst : f32 to vector<8x16xf32>
      %17 = arith.select %14, %15, %16 : vector<8x16xi1>, vector<8x16xf32>
      %c0_6 = arith.constant 0 : index
      %c0_7 = arith.constant 0 : index
      %18 = vector.load %arg12[%c0_6, %c0_7] : memref<1x16xf32, #tpu.memory_space<vmem>>, vector<1x16xf32>
      %cst_8 = arith.constant dense<0.000000e+00> : vector<16xf32>
      %19 = vector.multi_reduction <add>, %17, %cst_8 [0] : vector<8x16xf32> to vector<16xf32>
      %20 = vector.shape_cast %19 : vector<16xf32> to vector<1x16xf32>
      %21 = arith.addf %18, %20 : vector<1x16xf32>
      %c0_9 = arith.constant 0 : index
      %c0_10 = arith.constant 0 : index
      %22 = vector.load %arg12[%c0_9, %c0_10] : memref<1x16xf32, #tpu.memory_space<vmem>>, vector<1x16xf32>
      tpu.vector_store %arg12[%c0_9, %c0_10], %21 {strides = array<i32>} : memref<1x16xf32, #tpu.memory_space<vmem>>, vector<1x16xf32>,
      %c0_11 = arith.constant 0 : index
      %c0_12 = arith.constant 0 : index
      %23 = vector.load %arg13[%c0_11, %c0_12] : memref<1x16xf32, #tpu.memory_space<vmem>>, vector<1x16xf32>
      %24 = arith.mulf %17, %17 : vector<8x16xf32>
      %cst_13 = arith.constant dense<0.000000e+00> : vector<16xf32>
      %25 = vector.multi_reduction <add>, %24, %cst_13 [0] : vector<8x16xf32> to vector<16xf32>
      %26 = vector.shape_cast %25 : vector<16xf32> to vector<1x16xf32>
      %27 = arith.addf %23, %26 : vector<1x16xf32>
      %c0_14 = arith.constant 0 : index
      %c0_15 = arith.constant 0 : index
      %28 = vector.load %arg13[%c0_14, %c0_15] : memref<1x16xf32, #tpu.memory_space<vmem>>, vector<1x16xf32>
      tpu.vector_store %arg13[%c0_14, %c0_15], %27 {strides = array<i32>} : memref<1x16xf32, #tpu.memory_space<vmem>>, vector<1x16xf32>,
      %c0_i32_16 = arith.constant 0 : i32
      %29 = arith.cmpi eq, %arg1, %c0_i32_16 : i32
      %30 = arith.extui %29 : i1 to i32
      %c0_i32_17 = arith.constant 0 : i32
      %31 = arith.cmpi ne, %30, %c0_i32_17 : i32
      scf.if %31 {
        %c0_18 = arith.constant 0 : index
        %c0_19 = arith.constant 0 : index
        %32 = vector.load %arg12[%c0_18, %c0_19] : memref<1x16xf32, #tpu.memory_space<vmem>>, vector<1x16xf32>
        %cst_20 = arith.constant 1.250000e-01 : f32
        %33 = vector.broadcast %cst_20 : f32 to vector<1x16xf32>
        %34 = arith.mulf %32, %33 : vector<1x16xf32>
        %c0_21 = arith.constant 0 : index
        %c0_22 = arith.constant 0 : index
        %35 = vector.load %arg13[%c0_21, %c0_22] : memref<1x16xf32, #tpu.memory_space<vmem>>, vector<1x16xf32>
        %cst_23 = arith.constant 1.250000e-01 : f32
        %36 = vector.broadcast %cst_23 : f32 to vector<1x16xf32>
        %37 = arith.mulf %35, %36 : vector<1x16xf32>
        %38 = arith.mulf %34, %34 : vector<1x16xf32>
        %39 = arith.subf %37, %38 : vector<1x16xf32>
        %cst_24 = arith.constant 0.000000e+00 : f32
        %40 = vector.broadcast %cst_24 : f32 to vector<1x16xf32>
        %41 = arith.maximumf %39, %40 : vector<1x16xf32>
        %c0_25 = arith.constant 0 : index
        %c0_26 = arith.constant 0 : index
        %42 = vector.load %arg3[%c0_25, %c0_26] : memref<1x16xf32, #tpu.memory_space<vmem>>, vector<1x16xf32>
        %cst_27 = arith.constant 9.99999974E-6 : f32
        %43 = vector.broadcast %cst_27 : f32 to vector<1x16xf32>
        %44 = arith.addf %41, %43 : vector<1x16xf32>
        %45 = math.rsqrt %44 : vector<1x16xf32>
        %46 = arith.mulf %42, %45 : vector<1x16xf32>
        %c0_28 = arith.constant 0 : index
        %c0_29 = arith.constant 0 : index
        %47 = vector.load %arg14[%c0_28, %c0_29] : memref<1x16xf32, #tpu.memory_space<vmem>>, vector<1x16xf32>
        tpu.vector_store %arg14[%c0_28, %c0_29], %46 {strides = array<i32>} : memref<1x16xf32, #tpu.memory_space<vmem>>, vector<1x16xf32>,
        %c0_30 = arith.constant 0 : index
        %c0_31 = arith.constant 0 : index
        %48 = vector.load %arg4[%c0_30, %c0_31] : memref<1x16xf32, #tpu.memory_space<vmem>>, vector<1x16xf32>
        %49 = arith.mulf %34, %46 : vector<1x16xf32>
        %50 = arith.subf %48, %49 : vector<1x16xf32>
        %c0_32 = arith.constant 0 : index
        %c0_33 = arith.constant 0 : index
        %51 = vector.load %arg15[%c0_32, %c0_33] : memref<1x16xf32, #tpu.memory_space<vmem>>, vector<1x16xf32>
        tpu.vector_store %arg15[%c0_32, %c0_33], %50 {strides = array<i32>} : memref<1x16xf32, #tpu.memory_space<vmem>>, vector<1x16xf32>,
      } else {
      }
    } else {
    }
    %c1_i32 = arith.constant 1 : i32
    %3 = arith.cmpi eq, %arg0, %c1_i32 : i32
    %4 = arith.extui %3 : i1 to i32
    %c0_i32_1 = arith.constant 0 : i32
    %5 = arith.cmpi ne, %4, %c0_i32_1 : i32
    scf.if %5 {
      %c0 = arith.constant 0 : index
      %c0_2 = arith.constant 0 : index
      %6 = vector.load %arg2[%c0, %c0_2] : memref<8x16xf32, #tpu.memory_space<vmem>>, vector<8x16xf32>
      %c0_3 = arith.constant 0 : index
      %c0_4 = arith.constant 0 : index
      %7 = vector.load %arg14[%c0_3, %c0_4] : memref<1x16xf32, #tpu.memory_space<vmem>>, vector<1x16xf32>
      %8 = vector.broadcast %7 : vector<1x16xf32> to vector<8x16xf32>
      %9 = arith.mulf %6, %8 : vector<8x16xf32>
      %c0_5 = arith.constant 0 : index
      %c0_6 = arith.constant 0 : index
      %10 = vector.load %arg15[%c0_5, %c0_6] : memref<1x16xf32, #tpu.memory_space<vmem>>, vector<1x16xf32>
      %11 = vector.broadcast %10 : vector<1x16xf32> to vector<8x16xf32>
      %12 = arith.addf %9, %11 : vector<8x16xf32>
      %c0_7 = arith.constant 0 : index
      %c0_8 = arith.constant 0 : index
      %13 = vector.load %arg5[%c0_7, %c0_8] : memref<16x128xf32, #tpu.memory_space<vmem>>, vector<16x128xf32>
      %cst = arith.constant dense<0.000000e+00> : vector<8x128xf32>
      %14 = tpu.matmul %12, %13, %cst {dimension_numbers = #tpu.dot_dimension_numbers<[1], [0], [0], [1], [0, 0, 1, 1], [], []>} : vector<8x16xf32>, vector<16x128xf32>, vector<8x128xf32> -> vector<8x128xf32>
      %c0_9 = arith.constant 0 : index
      %c0_10 = arith.constant 0 : index
      %15 = vector.load %arg6[%c0_9, %c0_10] : memref<1x128xf32, #tpu.memory_space<vmem>>, vector<1x128xf32>
      %16 = vector.broadcast %15 : vector<1x128xf32> to vector<8x128xf32>
      %17 = arith.addf %14, %16 : vector<8x128xf32>
      %cst_11 = arith.constant 0.000000e+00 : f32
      %18 = vector.broadcast %cst_11 : f32 to vector<8x128xf32>
      %19 = arith.maximumf %17, %18 : vector<8x128xf32>
      %c0_12 = arith.constant 0 : index
      %c0_13 = arith.constant 0 : index
      %20 = vector.load %arg7[%c0_12, %c0_13] : memref<128x128xf32, #tpu.memory_space<vmem>>, vector<128x128xf32>
      %cst_14 = arith.constant dense<0.000000e+00> : vector<8x128xf32>
      %21 = tpu.matmul %19, %20, %cst_14 {dimension_numbers = #tpu.dot_dimension_numbers<[1], [0], [0], [1], [0, 0, 1, 1], [], []>} : vector<8x128xf32>, vector<128x128xf32>, vector<8x128xf32> -> vector<8x128xf32>
      %c0_15 = arith.constant 0 : index
      %c0_16 = arith.constant 0 : index
      %22 = vector.load %arg8[%c0_15, %c0_16] : memref<1x128xf32, #tpu.memory_space<vmem>>, vector<1x128xf32>
      %23 = vector.broadcast %22 : vector<1x128xf32> to vector<8x128xf32>
      %24 = arith.addf %21, %23 : vector<8x128xf32>
      %cst_17 = arith.constant 0.000000e+00 : f32
      %25 = vector.broadcast %cst_17 : f32 to vector<8x128xf32>
      %26 = arith.maximumf %24, %25 : vector<8x128xf32>
      %c0_18 = arith.constant 0 : index
      %c0_19 = arith.constant 0 : index
      %27 = vector.load %arg9[%c0_18, %c0_19] : memref<128x128xf32, #tpu.memory_space<vmem>>, vector<128x128xf32>
      %cst_20 = arith.constant dense<0.000000e+00> : vector<8x128xf32>
      %28 = tpu.matmul %26, %27, %cst_20 {dimension_numbers = #tpu.dot_dimension_numbers<[1], [0], [0], [1], [0, 0, 1, 1], [], []>} : vector<8x128xf32>, vector<128x128xf32>, vector<8x128xf32> -> vector<8x128xf32>
      %29 = vector.extract_strided_slice %28 {offsets = [0, 0], sizes = [8, 4], strides = [1, 1]} : vector<8x128xf32> to vector<8x4xf32>
      %c0_21 = arith.constant 0 : index
      %c0_22 = arith.constant 0 : index
      %30 = vector.load %arg10[%c0_21, %c0_22] : memref<1x4xf32, #tpu.memory_space<vmem>>, vector<1x4xf32>
      %31 = vector.broadcast %30 : vector<1x4xf32> to vector<8x4xf32>
      %32 = arith.addf %29, %31 : vector<8x4xf32>
      %c0_23 = arith.constant 0 : index
      %c0_24 = arith.constant 0 : index
      %33 = vector.load %arg11[%c0_23, %c0_24] : memref<8x4xf32, #tpu.memory_space<vmem>>, vector<8x4xf32>
      tpu.vector_store %arg11[%c0_23, %c0_24], %32 {strides = array<i32>} : memref<8x4xf32, #tpu.memory_space<vmem>>, vector<8x4xf32>,
    } else {
    }
    return
  }
  func.func @transform_0(%arg0: i32, %arg1: i32) -> (i32, i32) {
    %c0_i32 = arith.constant 0 : i32
    %c0_i32_0 = arith.constant 0 : i32
    return %arg1, %c0_i32 : i32, i32
  }
  func.func @transform_1(%arg0: i32, %arg1: i32) -> (i32, i32) {
    %c0_i32 = arith.constant 0 : i32
    %c0_i32_0 = arith.constant 0 : i32
    %c0_i32_1 = arith.constant 0 : i32
    return %c0_i32, %c0_i32_0 : i32, i32
  }
  func.func @transform_2(%arg0: i32, %arg1: i32) -> (i32, i32) {
    %c0_i32 = arith.constant 0 : i32
    %c0_i32_0 = arith.constant 0 : i32
    %c0_i32_1 = arith.constant 0 : i32
    return %c0_i32, %c0_i32_0 : i32, i32
  }
  func.func @transform_3(%arg0: i32, %arg1: i32) -> (i32, i32) {
    %c0_i32 = arith.constant 0 : i32
    %c0_i32_0 = arith.constant 0 : i32
    %c0_i32_1 = arith.constant 0 : i32
    return %c0_i32, %c0_i32_0 : i32, i32
  }
  func.func @transform_4(%arg0: i32, %arg1: i32) -> (i32, i32) {
    %c0_i32 = arith.constant 0 : i32
    %c0_i32_0 = arith.constant 0 : i32
    %c0_i32_1 = arith.constant 0 : i32
    return %c0_i32, %c0_i32_0 : i32, i32
  }
  func.func @transform_5(%arg0: i32, %arg1: i32) -> (i32, i32) {
    %c0_i32 = arith.constant 0 : i32
    %c0_i32_0 = arith.constant 0 : i32
    %c0_i32_1 = arith.constant 0 : i32
    return %c0_i32, %c0_i32_0 : i32, i32
  }
  func.func @transform_6(%arg0: i32, %arg1: i32) -> (i32, i32) {
    %c0_i32 = arith.constant 0 : i32
    %c0_i32_0 = arith.constant 0 : i32
    %c0_i32_1 = arith.constant 0 : i32
    return %c0_i32, %c0_i32_0 : i32, i32
  }
  func.func @transform_7(%arg0: i32, %arg1: i32) -> (i32, i32) {
    %c0_i32 = arith.constant 0 : i32
    %c0_i32_0 = arith.constant 0 : i32
    %c0_i32_1 = arith.constant 0 : i32
    return %c0_i32, %c0_i32_0 : i32, i32
  }
  func.func @transform_8(%arg0: i32, %arg1: i32) -> (i32, i32) {
    %c0_i32 = arith.constant 0 : i32
    %c0_i32_0 = arith.constant 0 : i32
    %c0_i32_1 = arith.constant 0 : i32
    return %c0_i32, %c0_i32_0 : i32, i32
  }
  func.func @transform_9(%arg0: i32, %arg1: i32) -> (i32, i32) {
    %c0_i32 = arith.constant 0 : i32
    %c0_i32_0 = arith.constant 0 : i32
    return %arg1, %c0_i32 : i32, i32
  }
}

</mosaic_0001>

<llo_original>
// kernel: tpu_custom_call.1
$region0: #{tpu_custom_call.1}
  #allocation0 [shape = 'u32[]', space=smem, size = 0x4, offset = 0x4, fixed_abs, tag = 'smem constant byte address 0x4 - core index']
  #allocation1 [shape = 'u32[72,128]{1,0:T(1,128)}', space=vmem, size = 0x9000, scoped, tag = 'internal scratch']
  #allocation2 [shape = 'f32[1,16]{1,0:T(1,128)}', space=vmem, size = 0x200, scoped, tag = 'scratch operand']
  #allocation3 [shape = 'f32[1,16]{1,0:T(1,128)}', space=vmem, size = 0x200, scoped, tag = 'scratch operand']
  #allocation4 [shape = 'f32[1,16]{1,0:T(1,128)}', space=vmem, size = 0x200, scoped, tag = 'scratch operand']
  #allocation5 [shape = 'f32[1,16]{1,0:T(1,128)}', space=vmem, size = 0x200, scoped, tag = 'scratch operand']
  %s0 = inlined_call_operand.hbm [shape: f32[8,16], index: 0, kind: input, shape index: {}]
  %s1 = inlined_call_operand.hbm [shape: f32[1,16], index: 1, kind: input, shape index: {}]
  %s2 = inlined_call_operand.vmem [shape: f32[1,16], index: 2, kind: input, shape index: {}]
  %s3 = inlined_call_operand.hbm [shape: f32[16,128], index: 3, kind: input, shape index: {}]
  %s4 = inlined_call_operand.vmem [shape: f32[1,128], index: 4, kind: input, shape index: {}]
  %s5 = inlined_call_operand.hbm [shape: f32[128,128], index: 5, kind: input, shape index: {}]
  %s6 = inlined_call_operand.vmem [shape: f32[1,128], index: 6, kind: input, shape index: {}]
  %s7 = inlined_call_operand.hbm [shape: f32[128,128], index: 7, kind: input, shape index: {}]
  %s8 = inlined_call_operand.vmem [shape: f32[1,4], index: 8, kind: input, shape index: {}]
  %s9 = inlined_call_operand.vmem [shape: f32[8,4], index: 9, kind: output, shape index: {}]
  %s10 = sld [smem:[#allocation0]]
  $region105: #{tpu_custom_call.1} parent=0
    _
  %s12 = ssub.s32 1, %s10
  %s13 = scalar_select 0, %s12, %s10
  $region1: #{tpu_custom_call.1} parent=0
    #allocation6 [shape = 'u8[4096]{0}', space=vmem, size = 0x1000, scoped, tag = 'input window, operand 0, single buffered']
    #allocation7 [shape = 's32[2]{0}', space=sflag, size = 0x8, scoped, tag = 'scoped memory for tpu_custom_call.1']
    #allocation8 [shape = 'u8[512]{0}', space=vmem, size = 0x400, scoped, tag = 'input window, operand 1, single buffered']
    #allocation9 [shape = 's32[1]{0}', space=sflag, size = 0x4, scoped, tag = 'scoped memory for tpu_custom_call.1']
    #allocation10 [shape = 'u8[8192]{0}', space=vmem, size = 0x2000, scoped, tag = 'input window, operand 3, single buffered']
    #allocation11 [shape = 'u8[65536]{0}', space=vmem, size = 0x10000, scoped, tag = 'input window, operand 5, single buffered']
    #allocation12 [shape = 's32[1]{0}', space=sflag, size = 0x4, scoped, tag = 'scoped memory for tpu_custom_call.1']
    #allocation13 [shape = 'u8[65536]{0}', space=vmem, size = 0x10000, scoped, tag = 'input window, operand 7, single buffered']
    %14 = vsyncpa [#allocation7], 0
    %15 = vsyncpa [#allocation9], 0
    %16 = vsyncpa [#allocation12], 0
    loop: start=0, step=1, limit=4
    $region2: #{tpu_custom_call.1} parent=1 // loop_pre_header
      _
    $region3: #{tpu_custom_call.1} parent=1 // loop_header
      %s18 = sphi 0, %s22
      %p19 = scmp.ge.s32.totalorder %s18, 4
      %s25 = sphi 0, %s37
      %s26 = sphi 0, %s33
      %s27 = sphi 0, %s25
      %s28 = sphi 0, %s26
      %s29 = sphi 0, %s27
      %s30 = sphi 0, %s28
      %s40 = sphi 0, %s42
      %s43 = sphi 0, %s40
      %s44 = sphi 0, %s43
      %s60 = sphi 0, %s44
      %s64 = sphi 0, %s64
      %s66 = sphi 0, %s64
      %s67 = sphi 0, %s66
      %s81 = sphi 0, %s67
      %s85 = sphi 0, %s85
      %s87 = sphi 0, %s85
      %s88 = sphi 0, %s87
      %s102 = sphi 0, %s88
      %s106 = sphi 0, %s106
      %s108 = sphi 0, %s106
      %s109 = sphi 0, %s108
      %s123 = sphi 0, %s109
      %s127 = sphi 0, %s127
      %s129 = sphi 0, %s127
      %s130 = sphi 0, %s129
      %s144 = sphi 0, %s130
      %s148 = sphi 0, %s148
      %s150 = sphi 0, %s148
      %s151 = sphi 0, %s150
      %s165 = sphi 0, %s151
      %s169 = sphi 0, %s169
      %s171 = sphi 0, %s169
      %s172 = sphi 0, %s171
      %s186 = sphi 0, %s172
      %s190 = sphi 0, %s190
      %s192 = sphi 0, %s190
      %s193 = sphi 0, %s192
      %s207 = sphi 0, %s193
      %s211 = sphi 0, %s211
      %s213 = sphi 0, %s211
      %s214 = sphi 0, %s213
      %s228 = sphi 0, %s214
      %s234 = sphi 0, %s236
      %s237 = sphi 0, %s234
      %s238 = sphi 0, %s237
      %s254 = sphi 0, %s238
    $region4: #{tpu_custom_call.1} parent=1 // loop_header_branch
      %21 = sbr.rel (%p19) target = $region8
    $region5: #{tpu_custom_call.1} parent=1 // loop_body
      %s23 = ssub.s32 %s18, 1
      %s24 = ssub.s32 %s18, 2
      %s31 = sadd.s32 1, %s26
      %p32 = scmp.ge.s32.totalorder %s31, 1
      %s33 = scalar_select %p32, 0, %s31
      %s34 = sadd.s32 1, %s25
      %s35 = scalar_select %p32, %s34, %s25
      %p36 = scmp.ge.s32.totalorder %s35, 2
      %s37 = scalar_select %p36, 0, %s35
      %s38 = ssub.s32 %s26, %s33
      %p39 = scmp.eq.s32.totalorder %s38, 0
      %s41 = sadd.s32 %s40, 1
      %s42 = scalar_select %p39, %s40, %s41
      %p45 = pneg %p39
      %p46 = scmp.eq.s32.totalorder %s18, 1
      %p47 = por %p45, %p46
      %p48 = scmp.ne.s32.totalorder %s40, %s43
      %p49 = scmp.eq.s32.totalorder %s18, 0
      %p50 = por %p48, %p49
      %p51 = scmp.ne.s32.totalorder %s40, %s43
      %p52 = scmp.eq.s32.totalorder %s23, 1
      %p53 = por %p51, %p52
      %p54 = scmp.ne.s32.totalorder %s43, %s44
      %p55 = scmp.eq.s32.totalorder %s23, 0
      %p56 = por %p54, %p55
      %p57 = scmp.ne.s32.totalorder %s43, %s44
      %p58 = scmp.eq.s32.totalorder %s24, 1
      %p59 = por %p57, %p58
      %p61 = scmp.ne.s32.totalorder %s44, %s60
      %p62 = scmp.eq.s32.totalorder %s24, 0
      %p63 = por %p61, %p62
      %s65 = sadd.s32 %s64, 1
      %p68 = scmp.eq.s32.totalorder %s18, 1
      %p69 = scmp.ne.s32.totalorder %s64, %s66
      %p70 = scmp.eq.s32.totalorder %s18, 0
      %p71 = por %p69, %p70
      %p72 = scmp.ne.s32.totalorder %s64, %s66
      %p73 = scmp.eq.s32.totalorder %s23, 1
      %p74 = por %p72, %p73
      %p75 = scmp.ne.s32.totalorder %s66, %s67
      %p76 = scmp.eq.s32.totalorder %s23, 0
      %p77 = por %p75, %p76
      %p78 = scmp.ne.s32.totalorder %s66, %s67
      %p79 = scmp.eq.s32.totalorder %s24, 1
      %p80 = por %p78, %p79
      %p82 = scmp.ne.s32.totalorder %s67, %s81
      %p83 = scmp.eq.s32.totalorder %s24, 0
      %p84 = por %p82, %p83
      %s86 = sadd.s32 %s85, 1
      %p89 = scmp.eq.s32.totalorder %s18, 1
      %p90 = scmp.ne.s32.totalorder %s85, %s87
      %p91 = scmp.eq.s32.totalorder %s18, 0
      %p92 = por %p90, %p91
      %p93 = scmp.ne.s32.totalorder %s85, %s87
      %p94 = scmp.eq.s32.totalorder %s23, 1
      %p95 = por %p93, %p94
      %p96 = scmp.ne.s32.totalorder %s87, %s88
      %p97 = scmp.eq.s32.totalorder %s23, 0
      %p98 = por %p96, %p97
      %p99 = scmp.ne.s32.totalorder %s87, %s88
      %p100 = scmp.eq.s32.totalorder %s24, 1
      %p101 = por %p99, %p100
      %p103 = scmp.ne.s32.totalorder %s88, %s102
      %p104 = scmp.eq.s32.totalorder %s24, 0
      %p105 = por %p103, %p104
      %s107 = sadd.s32 %s106, 1
      %p110 = scmp.eq.s32.totalorder %s18, 1
      %p111 = scmp.ne.s32.totalorder %s106, %s108
      %p112 = scmp.eq.s32.totalorder %s18, 0
      %p113 = por %p111, %p112
      %p114 = scmp.ne.s32.totalorder %s106, %s108
      %p115 = scmp.eq.s32.totalorder %s23, 1
      %p116 = por %p114, %p115
      %p117 = scmp.ne.s32.totalorder %s108, %s109
      %p118 = scmp.eq.s32.totalorder %s23, 0
      %p119 = por %p117, %p118
      %p120 = scmp.ne.s32.totalorder %s108, %s109
      %p121 = scmp.eq.s32.totalorder %s24, 1
      %p122 = por %p120, %p121
      %p124 = scmp.ne.s32.totalorder %s109, %s123
      %p125 = scmp.eq.s32.totalorder %s24, 0
      %p126 = por %p124, %p125
      %s128 = sadd.s32 %s127, 1
      %p131 = scmp.eq.s32.totalorder %s18, 1
      %p132 = scmp.ne.s32.totalorder %s127, %s129
      %p133 = scmp.eq.s32.totalorder %s18, 0
      %p134 = por %p132, %p133
      %p135 = scmp.ne.s32.totalorder %s127, %s129
      %p136 = scmp.eq.s32.totalorder %s23, 1
      %p137 = por %p135, %p136
      %p138 = scmp.ne.s32.totalorder %s129, %s130
      %p139 = scmp.eq.s32.totalorder %s23, 0
      %p140 = por %p138, %p139
      %p141 = scmp.ne.s32.totalorder %s129, %s130
      %p142 = scmp.eq.s32.totalorder %s24, 1
      %p143 = por %p141, %p142
      %p145 = scmp.ne.s32.totalorder %s130, %s144
      %p146 = scmp.eq.s32.totalorder %s24, 0
      %p147 = por %p145, %p146
      %s149 = sadd.s32 %s148, 1
      %p152 = scmp.eq.s32.totalorder %s18, 1
      %p153 = scmp.ne.s32.totalorder %s148, %s150
      %p154 = scmp.eq.s32.totalorder %s18, 0
      %p155 = por %p153, %p154
      %p156 = scmp.ne.s32.totalorder %s148, %s150
      %p157 = scmp.eq.s32.totalorder %s23, 1
      %p158 = por %p156, %p157
      %p159 = scmp.ne.s32.totalorder %s150, %s151
      %p160 = scmp.eq.s32.totalorder %s23, 0
      %p161 = por %p159, %p160
      %p162 = scmp.ne.s32.totalorder %s150, %s151
      %p163 = scmp.eq.s32.totalorder %s24, 1
      %p164 = por %p162, %p163
      %p166 = scmp.ne.s32.totalorder %s151, %s165
      %p167 = scmp.eq.s32.totalorder %s24, 0
      %p168 = por %p166, %p167
      %s170 = sadd.s32 %s169, 1
      %p173 = scmp.eq.s32.totalorder %s18, 1
      %p174 = scmp.ne.s32.totalorder %s169, %s171
      %p175 = scmp.eq.s32.totalorder %s18, 0
      %p176 = por %p174, %p175
      %p177 = scmp.ne.s32.totalorder %s169, %s171
      %p178 = scmp.eq.s32.totalorder %s23, 1
      %p179 = por %p177, %p178
      %p180 = scmp.ne.s32.totalorder %s171, %s172
      %p181 = scmp.eq.s32.totalorder %s23, 0
      %p182 = por %p180, %p181
      %p183 = scmp.ne.s32.totalorder %s171, %s172
      %p184 = scmp.eq.s32.totalorder %s24, 1
      %p185 = por %p183, %p184
      %p187 = scmp.ne.s32.totalorder %s172, %s186
      %p188 = scmp.eq.s32.totalorder %s24, 0
      %p189 = por %p187, %p188
      %s191 = sadd.s32 %s190, 1
      %p194 = scmp.eq.s32.totalorder %s18, 1
      %p195 = scmp.ne.s32.totalorder %s190, %s192
      %p196 = scmp.eq.s32.totalorder %s18, 0
      %p197 = por %p195, %p196
      %p198 = scmp.ne.s32.totalorder %s190, %s192
      %p199 = scmp.eq.s32.totalorder %s23, 1
      %p200 = por %p198, %p199
      %p201 = scmp.ne.s32.totalorder %s192, %s193
      %p202 = scmp.eq.s32.totalorder %s23, 0
      %p203 = por %p201, %p202
      %p204 = scmp.ne.s32.totalorder %s192, %s193
      %p205 = scmp.eq.s32.totalorder %s24, 1
      %p206 = por %p204, %p205
      %p208 = scmp.ne.s32.totalorder %s193, %s207
      %p209 = scmp.eq.s32.totalorder %s24, 0
      %p210 = por %p208, %p209
      %s212 = sadd.s32 %s211, 1
      %p215 = scmp.eq.s32.totalorder %s18, 1
      %p216 = scmp.ne.s32.totalorder %s211, %s213
      %p217 = scmp.eq.s32.totalorder %s18, 0
      %p218 = por %p216, %p217
      %p219 = scmp.ne.s32.totalorder %s211, %s213
      %p220 = scmp.eq.s32.totalorder %s23, 1
      %p221 = por %p219, %p220
      %p222 = scmp.ne.s32.totalorder %s213, %s214
      %p223 = scmp.eq.s32.totalorder %s23, 0
      %p224 = por %p222, %p223
      %p225 = scmp.ne.s32.totalorder %s213, %s214
      %p226 = scmp.eq.s32.totalorder %s24, 1
      %p227 = por %p225, %p226
      %p229 = scmp.ne.s32.totalorder %s214, %s228
      %p230 = scmp.eq.s32.totalorder %s24, 0
      %p231 = por %p229, %p230
      %s232 = ssub.s32 %s26, %s33
      %p233 = scmp.eq.s32.totalorder %s232, 0
      %s235 = sadd.s32 %s234, 1
      %s236 = scalar_select %p233, %s234, %s235
      %p239 = pneg %p233
      %p240 = scmp.eq.s32.totalorder %s18, 1
      %p241 = por %p239, %p240
      %p242 = scmp.ne.s32.totalorder %s234, %s237
      %p243 = scmp.eq.s32.totalorder %s18, 0
      %p244 = por %p242, %p243
      %p245 = scmp.ne.s32.totalorder %s234, %s237
      %p246 = scmp.eq.s32.totalorder %s23, 1
      %p247 = por %p245, %p246
      %p248 = scmp.ne.s32.totalorder %s237, %s238
      %p249 = scmp.eq.s32.totalorder %s23, 0
      %p250 = por %p248, %p249
      %p251 = scmp.ne.s32.totalorder %s237, %s238
      %p252 = scmp.eq.s32.totalorder %s24, 1
      %p253 = por %p251, %p252
      %p255 = scmp.ne.s32.totalorder %s238, %s254
      %p256 = scmp.eq.s32.totalorder %s24, 0
      %p257 = por %p255, %p256
      %p258 = scmp.le.s32.totalorder 1, %s18
      %p259 = scmp.lt.s32.totalorder %s18, 3
      %p260 = pnand %p258, %p259
      %p261 = pneg %p260
      // Predicated region
      $region9: #{tpu_custom_call.1} parent=5 // pred_check
        _
      $region10: #{tpu_custom_call.1} parent=5 // pred_check_branch
        %263 = sbr.rel (%p260) target = $region12
      $region11: #{tpu_custom_call.1} parent=5 // pred_region
        %s264 = ssub.s32 %s18, 1
        // Predicated region
        $region13: #{tpu_custom_call.1} parent=11 // pred_check
          %p265 = pneg %p56
        $region14: #{tpu_custom_call.1} parent=11 // pred_check_branch
          %267 = sbr.rel (%p265) target = $region16
        $region15: #{tpu_custom_call.1} parent=11 // pred_region
          %269 = vsyncadd [#allocation7], 0
          %s270 = smul.addr %s28, 8
          %s271 = scalar_lea.hbm %s0, %s270
          %s273 = sshll.u32 %s271, 4
          %s274 = int_to_ptr.hbm [resolvable:$true] %s273
          %s275 = sshll.u32 [#allocation6], 4
          %s276 = int_to_ptr.vmem [resolvable:$true] %s275
          %278 = dma.hbm_to_vmem [thread:$0]  %s274, 128, %s276, [#allocation7]
        $region16: #{tpu_custom_call.1} parent=11 // pred_fallthru
          _
        // Predicated region
        $region17: #{tpu_custom_call.1} parent=11 // pred_check
          %p279 = pneg %p77
        $region18: #{tpu_custom_call.1} parent=11 // pred_check_branch
          %281 = sbr.rel (%p279) target = $region20
        $region19: #{tpu_custom_call.1} parent=11 // pred_region
          %283 = vsyncadd [#allocation9], 0
          %s285 = sshll.u32 %s1, 4
          %s286 = int_to_ptr.hbm [resolvable:$true] %s285
          %s287 = sshll.u32 [#allocation8], 4
          %s288 = int_to_ptr.vmem [resolvable:$true] %s287
          %290 = dma.hbm_to_vmem [thread:$0]  %s286, 16, %s288, [#allocation9]
        $region20: #{tpu_custom_call.1} parent=11 // pred_fallthru
          _
        // Predicated region
        $region21: #{tpu_custom_call.1} parent=11 // pred_check
          %p291 = pneg %p98
        $region22: #{tpu_custom_call.1} parent=11 // pred_check_branch
          %293 = sbr.rel (%p291) target = $region24
        $region23: #{tpu_custom_call.1} parent=11 // pred_region
          _
        $region24: #{tpu_custom_call.1} parent=11 // pred_fallthru
          _
        // Predicated region
        $region25: #{tpu_custom_call.1} parent=11 // pred_check
          %p294 = pneg %p119
        $region26: #{tpu_custom_call.1} parent=11 // pred_check_branch
          %296 = sbr.rel (%p294) target = $region28
        $region27: #{tpu_custom_call.1} parent=11 // pred_region
          %298 = vsyncadd [#allocation9], 0
          %s299 = sshll.u32 %s3, 4
          %s300 = int_to_ptr.hbm [resolvable:$true] %s299
          %s301 = sshll.u32 [#allocation10], 4
          %s302 = int_to_ptr.vmem [resolvable:$true] %s301
          %307 = dma.hbm_to_vmem [thread:$0]  %s300, 256, %s302, [#allocation9], 128, 128, 8
        $region28: #{tpu_custom_call.1} parent=11 // pred_fallthru
          _
        // Predicated region
        $region29: #{tpu_custom_call.1} parent=11 // pred_check
          %p308 = pneg %p140
        $region30: #{tpu_custom_call.1} parent=11 // pred_check_branch
          %310 = sbr.rel (%p308) target = $region32
        $region31: #{tpu_custom_call.1} parent=11 // pred_region
          _
        $region32: #{tpu_custom_call.1} parent=11 // pred_fallthru
          _
        // Predicated region
        $region33: #{tpu_custom_call.1} parent=11 // pred_check
          %p311 = pneg %p161
        $region34: #{tpu_custom_call.1} parent=11 // pred_check_branch
          %313 = sbr.rel (%p311) target = $region36
        $region35: #{tpu_custom_call.1} parent=11 // pred_region
          %315 = vsyncadd [#allocation12], 0
          %s316 = sshll.u32 %s5, 4
          %s317 = int_to_ptr.hbm [resolvable:$true] %s316
          %s318 = sshll.u32 [#allocation11], 4
          %s319 = int_to_ptr.vmem [resolvable:$true] %s318
          %324 = dma.hbm_to_vmem [thread:$0]  %s317, 2048, %s319, [#allocation12], 128, 128, 8
        $region36: #{tpu_custom_call.1} parent=11 // pred_fallthru
          _
        // Predicated region
        $region37: #{tpu_custom_call.1} parent=11 // pred_check
          %p325 = pneg %p182
        $region38: #{tpu_custom_call.1} parent=11 // pred_check_branch
          %327 = sbr.rel (%p325) target = $region40
        $region39: #{tpu_custom_call.1} parent=11 // pred_region
          _
        $region40: #{tpu_custom_call.1} parent=11 // pred_fallthru
          _
        // Predicated region
        $region41: #{tpu_custom_call.1} parent=11 // pred_check
          %p328 = pneg %p203
        $region42: #{tpu_custom_call.1} parent=11 // pred_check_branch
          %330 = sbr.rel (%p328) target = $region44
        $region43: #{tpu_custom_call.1} parent=11 // pred_region
          %332 = vsyncadd [#allocation12], 0
          %s333 = sshll.u32 %s7, 4
          %s334 = int_to_ptr.hbm [resolvable:$true] %s333
          %s335 = sshll.u32 [#allocation13], 4
          %s336 = int_to_ptr.vmem [resolvable:$true] %s335
          %341 = dma.hbm_to_vmem [thread:$0]  %s334, 2048, %s336, [#allocation12], 128, 128, 8
        $region44: #{tpu_custom_call.1} parent=11 // pred_fallthru
          _
        // Predicated region
        $region45: #{tpu_custom_call.1} parent=11 // pred_check
          %p342 = pneg %p224
        $region46: #{tpu_custom_call.1} parent=11 // pred_check_branch
          %344 = sbr.rel (%p342) target = $region48
        $region47: #{tpu_custom_call.1} parent=11 // pred_region
          _
        $region48: #{tpu_custom_call.1} parent=11 // pred_fallthru
          _
      $region12: #{tpu_custom_call.1} parent=5 // pred_fallthru
        _
      %p345 = scmp.lt.s32.totalorder %s18, 2
      // Predicated region
      $region49: #{tpu_custom_call.1} parent=5 // pred_check
        %p346 = pneg %p345
      $region50: #{tpu_custom_call.1} parent=5 // pred_check_branch
        %348 = sbr.rel (%p346) target = $region52
      $region51: #{tpu_custom_call.1} parent=5 // pred_region
        _
      $region52: #{tpu_custom_call.1} parent=5 // pred_fallthru
        _
      %p349 = scmp.le.s32.totalorder 1, %s18
      %p350 = scmp.lt.s32.totalorder %s18, 3
      %p351 = pnand %p349, %p350
      %p352 = pneg %p351
      // Predicated region
      $region53: #{tpu_custom_call.1} parent=5 // pred_check
        _
      $region54: #{tpu_custom_call.1} parent=5 // pred_check_branch
        %354 = sbr.rel (%p351) target = $region56
      $region55: #{tpu_custom_call.1} parent=5 // pred_region
        %s355 = ssub.s32 %s18, 1
        // Predicated region
        $region57: #{tpu_custom_call.1} parent=55 // pred_check
          %p356 = pneg %p56
        $region58: #{tpu_custom_call.1} parent=55 // pred_check_branch
          %358 = sbr.rel (%p356) target = $region60
        $region59: #{tpu_custom_call.1} parent=55 // pred_region
          %360 = dma.done [#allocation7], 128
        $region60: #{tpu_custom_call.1} parent=55 // pred_fallthru
          _
        // Predicated region
        $region61: #{tpu_custom_call.1} parent=55 // pred_check
          %p361 = pneg %p77
        $region62: #{tpu_custom_call.1} parent=55 // pred_check_branch
          %363 = sbr.rel (%p361) target = $region64
        $region63: #{tpu_custom_call.1} parent=55 // pred_region
          %365 = dma.done [#allocation9], 16
        $region64: #{tpu_custom_call.1} parent=55 // pred_fallthru
          _
        // Predicated region
        $region65: #{tpu_custom_call.1} parent=55 // pred_check
          %p366 = pneg %p119
        $region66: #{tpu_custom_call.1} parent=55 // pred_check_branch
          %368 = sbr.rel (%p366) target = $region68
        $region67: #{tpu_custom_call.1} parent=55 // pred_region
          %370 = dma.done [#allocation9], 256
        $region68: #{tpu_custom_call.1} parent=55 // pred_fallthru
          _
        // Predicated region
        $region69: #{tpu_custom_call.1} parent=55 // pred_check
          %p371 = pneg %p161
        $region70: #{tpu_custom_call.1} parent=55 // pred_check_branch
          %373 = sbr.rel (%p371) target = $region72
        $region71: #{tpu_custom_call.1} parent=55 // pred_region
          %375 = dma.done [#allocation12], 2048
        $region72: #{tpu_custom_call.1} parent=55 // pred_fallthru
          _
        // Predicated region
        $region73: #{tpu_custom_call.1} parent=55 // pred_check
          %p376 = pneg %p203
        $region74: #{tpu_custom_call.1} parent=55 // pred_check_branch
          %378 = sbr.rel (%p376) target = $region76
        $region75: #{tpu_custom_call.1} parent=55 // pred_region
          %380 = dma.done [#allocation12], 2048
        $region76: #{tpu_custom_call.1} parent=55 // pred_fallthru
          _
        %p381 = pneg %p56
        %p382 = pneg %p53
        %p383 = pneg %p77
        %p384 = pneg %p74
        %p385 = pneg %p98
        %p386 = pneg %p95
        %p387 = pneg %p119
        %p388 = pneg %p116
        %p389 = pneg %p140
        %p390 = pneg %p137
        %p391 = pneg %p161
        %p392 = pneg %p158
        %p393 = pneg %p182
        %p394 = pneg %p179
        %p395 = pneg %p203
        %p396 = pneg %p200
        %p397 = pneg %p224
        %p398 = pneg %p221
        %p399 = pneg %p250
        %p400 = pneg %p247
        %p401 = scmp.lt.s32.totalorder %s28, 0
        %s402 = scalar_select %p401, %s28, 0
        %s403 = smul.addr %s402, 8
        %s404 = scalar_lea.vmem %s9, %s403
        %p405 = scmp.lt.s32.totalorder %s28, 0
        %s406 = scalar_select %p405, %s28, 0
        %s407 = smul.addr %s406, 8
        %s408 = scalar_lea.vmem %s9, %s407
        %p409 = scmp.eq.s32.totalorder %s27, 0
        // Predicated region
        $region77: #{tpu_custom_call.1} parent=55 // pred_check
          %p410 = pneg %p409
        $region78: #{tpu_custom_call.1} parent=55 // pred_check_branch
          %412 = sbr.rel (%p410) target = $region80
        $region79: #{tpu_custom_call.1} parent=55 // pred_region
          %p413 = scmp.eq.s32.totalorder %s28, 0
          // Predicated region
          $region81: #{tpu_custom_call.1} parent=79 // pred_check
            %p414 = pneg %p413
          $region82: #{tpu_custom_call.1} parent=79 // pred_check_branch
            %416 = sbr.rel (%p414) target = $region84
          $region83: #{tpu_custom_call.1} parent=79 // pred_region
            %vm417 = vcmask 122880
            %418 = vst.msk [vmem:[#allocation2] sm:$0x1] %vm417, 0.0
            %419 = vst.msk [vmem:[#allocation3] sm:$0x1] %vm417, 0.0
          $region84: #{tpu_custom_call.1} parent=79 // pred_fallthru
            _
          %s420 = smul.u32 %s28, 8
          %v421 = vlaneseq
          %v422 = vshrl.u32 %v421, 7
          %v423 = vstv %s420
          %v424 = vadd.s32 %v423, %v422
          %vm425 = vcmp.lt.s32.totalorder %v424, 8
          %v426 = vld [vmem:[#allocation6] sm:$0xff]
          %v427 = vsel %vm425, %v426, 0.0
          %v428 = vld [vmem:[#allocation2] sm:$0x1]
          %vm429 = vcmask 130048
          %v430 = vsel %vm429, %v427, 0.0
          %v431 = vrot.slane %v430, 4
          %v432 = vadd.f32 %v430, %v431
          %v433 = vrot.slane %v432, 2
          %v434 = vadd.f32 %v432, %v433
          %v435 = vrot.slane %v434, 1
          %v436 = vadd.f32 %v434, %v435
          %v437 = vadd.f32 %v428, %v436
          %vm438 = vcmask 122880
          %439 = vst.msk [vmem:[#allocation2] sm:$0x1] %vm438, %v437
          %v440 = vld [vmem:[#allocation3] sm:$0x1]
          %v441 = vmul.f32 %v427, %v427
          %v442 = vsel %vm429, %v441, 0.0
          %v443 = vrot.slane %v442, 4
          %v444 = vadd.f32 %v442, %v443
          %v445 = vrot.slane %v444, 2
          %v446 = vadd.f32 %v444, %v445
          %v447 = vrot.slane %v446, 1
          %v448 = vadd.f32 %v446, %v447
          %v449 = vadd.f32 %v440, %v448
          %450 = vst.msk [vmem:[#allocation3] sm:$0x1] %vm438, %v449
          // Predicated region
          $region85: #{tpu_custom_call.1} parent=79 // pred_check
            %p451 = pneg %p413
          $region86: #{tpu_custom_call.1} parent=79 // pred_check_branch
            %453 = sbr.rel (%p451) target = $region88
          $region87: #{tpu_custom_call.1} parent=79 // pred_region
            %v454 = vld [vmem:[#allocation2] sm:$0x1]
            %v455 = vmul.f32 %v454, 0.125
            %v456 = vld [vmem:[#allocation3] sm:$0x1]
            %v457 = vmul.f32 %v456, 0.125
            %v458 = vmul.f32 %v455, %v455
            %v459 = vsub.f32 %v457, %v458
            %v460 = vmax.f32 %v459, 0.0
            %v461 = vld [vmem:[#allocation8] sm:$0x1]
            %v462 = vadd.f32 %v460, 1e-05
            %v463 = vrsqrt.pop %v462
            %v464 = vmul.f32 %v463, %v462
            %v465 = vmul.f32 %v464, %v463
            %v466 = vmul.f32 0.5, %v465
            %v467 = vsub.f32 1.5, %v466
            %v468 = vmul.f32 %v463, %v467
            %vm469 = vweird.f32 %v462
            %vm470 = vweird.f32 %v463
            %vm471 = vmor %vm469, %vm470
            %v472 = vsel %vm471, %v463, %v468
            %v473 = vmul.f32 %v461, %v472
            %474 = vst.msk [vmem:[#allocation4] sm:$0x1] %vm438, %v473
            %v475 = vld [vmem:[%s2] sm:$0x1]
            %v476 = vmul.f32 %v455, %v473
            %v477 = vsub.f32 %v475, %v476
            %478 = vst.msk [vmem:[#allocation5] sm:$0x1] %vm438, %v477
          $region88: #{tpu_custom_call.1} parent=79 // pred_fallthru
            _
        $region80: #{tpu_custom_call.1} parent=55 // pred_fallthru
          _
        %p479 = scmp.eq.s32.totalorder %s27, 1
        // Predicated region
        $region89: #{tpu_custom_call.1} parent=55 // pred_check
          %p480 = pneg %p479
        $region90: #{tpu_custom_call.1} parent=55 // pred_check_branch
          %482 = sbr.rel (%p480) target = $region92
        $region91: #{tpu_custom_call.1} parent=55 // pred_region
          %v483 = vld [vmem:[#allocation6] sm:$0xff]
          %v484 = vld [vmem:[#allocation4] sm:$0x1]
          %v486 = vperm.slane %v484, 0
          %v488 = vmul.f32 %v483, %v486
          %v489 = vld [vmem:[#allocation5] sm:$0x1]
          %v491 = vperm.slane %v489, 0
          %v493 = vadd.f32 %v488, %v491
          %v494 = vld [vmem:[#allocation10] sm:$0xff]
          %v495 = vld [vmem:[#allocation10 + $0x8] sm:$0xff]
          %v496 = vld [vmem:[%s4] sm:$0x1]
          %v498 = vperm.slane %v496, 0
          %vm500 = vcmask 130048
          %v502 = vsel %vm500, %v493, 0
          %504 = vmatpush.msra.mxu0 0.0
          %505 = vmatpush.msra.mxu0 0.0
          %506 = vmatpush.msra.mxu0 0.0
          %507 = vmatpush.msra.mxu0 0.0
          %508 = vmatpush.msra.mxu0 0.0
          %509 = vmatpush.msra.mxu0 0.0
          %510 = vmatpush.msra.mxu0 0.0
          %511 = vmatpush.msra.mxu0 0.0
          %512 = vmatpush.msra.mxu0 0.0
          %513 = vmatpush.msra.mxu0 0.0
          %514 = vmatpush.msra.mxu0 0.0
          %515 = vmatpush.msra.mxu0 0.0
          %516 = vmatpush.msra.mxu0 0.0
          %517 = vmatpush.msra.mxu0 0.0
          %518 = vmatpush.msra.mxu0 %v495
          %519 = vmatpush.msra.mxu0 %v494
          %520 = vmatmul.f32.gmra.mxu0 %v502
          %v521 = vpop.f32.mrf.mxu0
          %v522 = vadd.f32 %v498, %v521
          %523 = vdwg.mxu0
          %v524 = vmax.f32 %v522, 0.0
          %v525 = vld [vmem:[#allocation11] sm:$0xff]
          %v526 = vld [vmem:[#allocation11 + $0x8] sm:$0xff]
          %v527 = vld [vmem:[#allocation11 + $0x10] sm:$0xff]
          %v528 = vld [vmem:[#allocation11 + $0x18] sm:$0xff]
          %v529 = vld [vmem:[#allocation11 + $0x20] sm:$0xff]
          %v530 = vld [vmem:[#allocation11 + $0x28] sm:$0xff]
          %v531 = vld [vmem:[#allocation11 + $0x30] sm:$0xff]
          %v532 = vld [vmem:[#allocation11 + $0x38] sm:$0xff]
          %v533 = vld [vmem:[#allocation11 + $0x40] sm:$0xff]
          %v534 = vld [vmem:[#allocation11 + $0x48] sm:$0xff]
          %v535 = vld [vmem:[#allocation11 + $0x50] sm:$0xff]
          %v536 = vld [vmem:[#allocation11 + $0x58] sm:$0xff]
          %v537 = vld [vmem:[#allocation11 + $0x60] sm:$0xff]
          %v538 = vld [vmem:[#allocation11 + $0x68] sm:$0xff]
          %v539 = vld [vmem:[#allocation11 + $0x70] sm:$0xff]
          %v540 = vld [vmem:[#allocation11 + $0x78] sm:$0xff]
          %v541 = vld [vmem:[%s6] sm:$0x1]
          %v543 = vperm.slane %v541, 0
          %545 = vmatpush.msra.mxu0 %v540
          %546 = vmatpush.msra.mxu0 %v539
          %547 = vmatpush.msra.mxu0 %v538
          %548 = vmatpush.msra.mxu0 %v537
          %549 = vmatpush.msra.mxu0 %v536
          %550 = vmatpush.msra.mxu0 %v535
          %551 = vmatpush.msra.mxu0 %v534
          %552 = vmatpush.msra.mxu0 %v533
          %553 = vmatpush.msra.mxu0 %v532
          %554 = vmatpush.msra.mxu0 %v531
          %555 = vmatpush.msra.mxu0 %v530
          %556 = vmatpush.msra.mxu0 %v529
          %557 = vmatpush.msra.mxu0 %v528
          %558 = vmatpush.msra.mxu0 %v527
          %559 = vmatpush.msra.mxu0 %v526
          %560 = vmatpush.msra.mxu0 %v525
          %561 = vmatmul.f32.gmra.mxu0 %v524
          %v562 = vpop.f32.mrf.mxu0
          %v563 = vadd.f32 %v543, %v562
          %564 = vdwg.mxu0
          %v565 = vmax.f32 %v563, 0.0
          %v566 = vld [vmem:[#allocation13] sm:$0xff]
          %v567 = vld [vmem:[#allocation13 + $0x8] sm:$0xff]
          %v568 = vld [vmem:[#allocation13 + $0x10] sm:$0xff]
          %v569 = vld [vmem:[#allocation13 + $0x18] sm:$0xff]
          %v570 = vld [vmem:[#allocation13 + $0x20] sm:$0xff]
          %v571 = vld [vmem:[#allocation13 + $0x28] sm:$0xff]
          %v572 = vld [vmem:[#allocation13 + $0x30] sm:$0xff]
          %v573 = vld [vmem:[#allocation13 + $0x38] sm:$0xff]
          %v574 = vld [vmem:[#allocation13 + $0x40] sm:$0xff]
          %v575 = vld [vmem:[#allocation13 + $0x48] sm:$0xff]
          %v576 = vld [vmem:[#allocation13 + $0x50] sm:$0xff]
          %v577 = vld [vmem:[#allocation13 + $0x58] sm:$0xff]
          %v578 = vld [vmem:[#allocation13 + $0x60] sm:$0xff]
          %v579 = vld [vmem:[#allocation13 + $0x68] sm:$0xff]
          %v580 = vld [vmem:[#allocation13 + $0x70] sm:$0xff]
          %v581 = vld [vmem:[#allocation13 + $0x78] sm:$0xff]
          %582 = vmatpush.msra.mxu0 %v581
          %583 = vmatpush.msra.mxu0 %v580
          %584 = vmatpush.msra.mxu0 %v579
          %585 = vmatpush.msra.mxu0 %v578
          %586 = vmatpush.msra.mxu0 %v577
          %587 = vmatpush.msra.mxu0 %v576
          %588 = vmatpush.msra.mxu0 %v575
          %589 = vmatpush.msra.mxu0 %v574
          %590 = vmatpush.msra.mxu0 %v573
          %591 = vmatpush.msra.mxu0 %v572
          %592 = vmatpush.msra.mxu0 %v571
          %593 = vmatpush.msra.mxu0 %v570
          %594 = vmatpush.msra.mxu0 %v569
          %595 = vmatpush.msra.mxu0 %v568
          %596 = vmatpush.msra.mxu0 %v567
          %597 = vmatpush.msra.mxu0 %v566
          %598 = vmatmul.f32.gmra.mxu0 %v565
          %v599 = vpop.f32.mrf.mxu0
          %v600 = vadd.f32 0.0, %v599
          %601 = vdwg.mxu0
          %v602 = vld [vmem:[%s8] sm:$0x1]
          %v604 = vperm.slane %v602, 0
          %v606 = vadd.f32 %v600, %v604
          %vm607 = vcmask 31744
          %608 = vst.msk [vmem:[%s408] sm:$0xff] %vm607, %v606
        $region92: #{tpu_custom_call.1} parent=55 // pred_fallthru
          _
        %p609 = scmp.lt.s32.totalorder %s28, 0
        %s610 = scalar_select %p609, %s28, 0
        %s611 = smul.addr %s610, 8
        %s612 = scalar_lea.vmem %s9, %s611
        // Predicated region
        $region93: #{tpu_custom_call.1} parent=55 // pred_check
          %p613 = pneg %p247
        $region94: #{tpu_custom_call.1} parent=55 // pred_check_branch
          %615 = sbr.rel (%p613) target = $region96
        $region95: #{tpu_custom_call.1} parent=55 // pred_region
          _
        $region96: #{tpu_custom_call.1} parent=55 // pred_fallthru
          _
        // Predicated region
        $region97: #{tpu_custom_call.1} parent=55 // pred_check
          %p616 = pneg %p247
        $region98: #{tpu_custom_call.1} parent=55 // pred_check_branch
          %618 = sbr.rel (%p616) target = $region100
        $region99: #{tpu_custom_call.1} parent=55 // pred_region
          %p619 = scmp.lt.s32.totalorder %s28, 0
          %s620 = scalar_select %p619, %s28, 0
          %s621 = smul.addr %s620, 8
          %s622 = scalar_lea.vmem %s9, %s621
        $region100: #{tpu_custom_call.1} parent=55 // pred_fallthru
          _
      $region56: #{tpu_custom_call.1} parent=5 // pred_fallthru
        _
      %p623 = scmp.le.s32.totalorder 2, %s18
      // Predicated region
      $region101: #{tpu_custom_call.1} parent=5 // pred_check
        %p624 = pneg %p623
      $region102: #{tpu_custom_call.1} parent=5 // pred_check_branch
        %626 = sbr.rel (%p624) target = $region104
      $region103: #{tpu_custom_call.1} parent=5 // pred_region
        %s627 = ssub.s32 %s18, 2
      $region104: #{tpu_custom_call.1} parent=5 // pred_fallthru
        _
    $region6: #{tpu_custom_call.1} parent=1 // loop_footer
      %s22 = sadd.s32 1, %s18
    $region7: #{tpu_custom_call.1} parent=1 // loop_footer_branch
      %17 = sbr.rel target = $region3
    $region8: #{tpu_custom_call.1} parent=1 // loop_exit
      _
    %628 = vsyncpa [#allocation7], 1
    %s629 = scalar_lea.sflag [#allocation7], 1
    %630 = vsyncpa %s629, 1
    %631 = vsyncpa [#allocation9], 1
    %632 = vsyncpa [#allocation12], 1

</llo_original>
